<compile_context>
chip_gen: v5e
topology: v5e:2x2
jax: 0.10.0
libtpu: 0.0.40
codegen_flags: <defaults>
</compile_context>

<pallas_src>
import functools

import jax
import jax.numpy as jnp
from jax.experimental import pallas as pl
from jax.experimental.pallas import tpu as pltpu


_NEG_INF = -1e30  # finite "minus infinity": keeps masked softmax NaN-free


def _round_up(x, m):
    return (x + m - 1) // m * m


# ---------------------------------------------------------------------------
# Phase 1a: fused-row query projection  (B*Qp, Dq) @ (Dq, H) -> (B*Qp, H).
# ---------------------------------------------------------------------------
def _row_proj_kernel(x_ref, w_ref, o_ref):
    o_ref[...] = jnp.dot(x_ref[...], w_ref[...],
                         preferred_element_type=jnp.float32).astype(o_ref.dtype)


def _project_rows(x2d, w_t, out_dtype, tm=256):
    # Rows were padded to a multiple of tm (>= 256) so the MXU never sees a
    # skinny 8/16-row LHS and grid-step overhead stays minimal.
    M, D = x2d.shape
    H = w_t.shape[1]
    return pl.pallas_call(
        _row_proj_kernel,
        out_shape=jax.ShapeDtypeStruct((M, H), out_dtype),
        grid_spec=pltpu.PrefetchScalarGridSpec(
            num_scalar_prefetch=0,
            grid=(M // tm,),
            in_specs=[
                pl.BlockSpec((tm, D), lambda i: (i, 0)),
                pl.BlockSpec((D, H), lambda i: (0, 0)),   # weight fetched once
            ],
            out_specs=pl.BlockSpec((tm, H), lambda i: (i, 0)),
        ),
        compiler_params=pltpu.CompilerParams(
            dimension_semantics=("parallel",)),
    )(x2d, w_t)


# ---------------------------------------------------------------------------
# Phase 1b: key projection emitted pre-transposed:  kT[b] = w_k @ keys[b].T
# so phase 2 receives (B, H, Kp) with H on the sublane axis, K on lanes.
# ---------------------------------------------------------------------------
def _key_projT_kernel(k_ref, w_ref, o_ref):
    # o[h, k] = sum_d w[h, d] * keys[k, d]   ("NT" matmul on the MXU)
    o_ref[...] = jnp.einsum('hd,kd->hk', w_ref[...], k_ref[...],
                            preferred_element_type=jnp.float32).astype(o_ref.dtype)


def _project_keys_transposed(keys_p, w_k, kt, out_dtype):
    B, Kp, Dk = keys_p.shape
    H = w_k.shape[0]
    return pl.pallas_call(
        _key_projT_kernel,
        out_shape=jax.ShapeDtypeStruct((B, H, Kp), out_dtype),
        grid_spec=pltpu.PrefetchScalarGridSpec(
            num_scalar_prefetch=0,
            grid=(B, Kp // kt),
            in_specs=[
                pl.BlockSpec((None, kt, Dk), lambda b, k: (b, k, 0)),
                pl.BlockSpec((H, Dk), lambda b, k: (0, 0)),
            ],
            out_specs=pl.BlockSpec((None, H, kt), lambda b, k: (b, 0, k)),
        ),
        compiler_params=pltpu.CompilerParams(
            dimension_semantics=("parallel", "parallel")),
    )(keys_p, w_k)


# ---------------------------------------------------------------------------
# Phase 2: K-tiled additive attention with online softmax.
# ---------------------------------------------------------------------------
def _attn_kernel(wv_ref, q_ref, kT_ref, v_ref, mask_ref, out_ref,
                 m_ref, l_ref, *, num_hiddens, compute_dtype):
    ki = pl.program_id(2)

    @pl.when(ki == 0)
    def _init():
        # m starts at -inf; scores are >= -1e30 so alpha = exp(-inf - m_new)
        # is exactly 0 on the first K tile (exp argument always <= 0).
        m_ref[...] = jnp.full(m_ref.shape, -jnp.inf, dtype=m_ref.dtype)
        l_ref[...] = jnp.zeros(l_ref.shape, dtype=l_ref.dtype)
        out_ref[...] = jnp.zeros(out_ref.shape, dtype=out_ref.dtype)

    q = q_ref[...]                        # (Qt, H)  queries for this tile
    kT = kT_ref[...]                      # (H, Kt)  keys, H on the sublane axis
    qt = q.shape[0]
    kt = kT.shape[1]

    # scores[q, k] = sum_h w_v[h] * tanh(q_proj[q, h] + k_proj[k, h]);
    # accumulated per hidden unit so no dimension is lane-padded and the live
    # working set is one (Qt, Kt) plane (fits in vregs, no spills).
    scores = jnp.zeros((qt, kt), dtype=jnp.float32)
    for h in range(num_hiddens):          # static unroll over hidden units
        feat = jnp.tanh(q[:, h:h + 1] + kT[h:h + 1, :])      # (Qt, Kt)
        scores = scores + wv_ref[h] * feat                   # f32 accumulate

    # Additive-infinity mask from the raw int8 mask tile (1 == masked); padded
    # key columns and padded query rows arrive pre-marked as masked.
    scores = jnp.where(mask_ref[...] != 0, _NEG_INF, scores)

    # Online (flash-style) softmax; out_ref doubles as the accumulator because
    # its block index is constant along the ki grid axis.
    m_prev = m_ref[...]
    m_new = jnp.maximum(m_prev, jnp.max(scores, axis=-1, keepdims=True))
    alpha = jnp.exp(m_prev - m_new)                          # (Qt, 1)
    p = jnp.exp(scores - m_new)                              # (Qt, Kt)
    l_ref[...] = alpha * l_ref[...] + jnp.sum(p, axis=-1, keepdims=True)
    out_ref[...] = alpha * out_ref[...] + jnp.dot(
        p.astype(compute_dtype), v_ref[...],
        preferred_element_type=jnp.float32)
    m_ref[...] = m_new

    @pl.when(ki == pl.num_programs(2) - 1)
    def _finalize():
        l = l_ref[...]
        inv = pl.reciprocal(l, approx=True)
        inv = inv * (2.0 - l * inv)       # one Newton step -> ~f32 accuracy
        out_ref[...] = out_ref[...] * inv

    # NOTE: fully-masked *real* query rows produce a finite uniform softmax
    # here (-1e30 bias) instead of the reference's NaN (-inf): intentional.
    # TODO(synk): nn.Dropout is declared in the module but never applied in
    # forward, so no dropout is performed here either.


def _pick_tiles(Q, K):
    """K on lanes (128-multiples), Q on sublanes (8-multiples); cap the
    per-h (Qt, Kt) planes so scores + temporaries stay inside the vreg file."""
    Kt = min(512, _round_up(K, 128))
    Qt = min(64, _round_up(Q, 8))
    if Qt * Kt > 16384:
        Qt = max(8, (16384 // Kt) // 8 * 8)
    return Qt, Kt


def additive_attention(queries, keys, values, mask, w_q, w_k, w_v,
                       *, compute_dtype=jnp.bfloat16):
    """queries (B,Q,Dq), keys (B,K,Dk), values (B,K,Dv), mask (B,Q,K) bool
    (True == masked), w_q (H,Dq), w_k (H,Dk), w_v (1,H)  ->  (B,Q,Dv) float32.

    compute_dtype=bfloat16 (default) uses the bf16 VPU/EUP/MXU paths of
    v6e/v7x; use float32 for strict accuracy or on v5e (no bf16 VPU/EUP).
    """
    B, Q, Dq = queries.shape
    _, K, Dk = keys.shape
    _, _, Dv = values.shape
    H = w_q.shape[0]

    Qt, Kt = _pick_tiles(Q, K)
    Qp = _round_up(Q, Qt)
    Kp = _round_up(K, Kt)

    # ---- Phase 1a: query projection, batch fused into rows (M >= 256) ----
    qz = jnp.pad(queries, ((0, 0), (0, Qp - Q), (0, 0))).astype(compute_dtype)
    q2d = qz.reshape(B * Qp, Dq)
    Mq = _round_up(B * Qp, 256)
    q2d = jnp.pad(q2d, ((0, Mq - B * Qp), (0, 0)))
    q_proj = _project_rows(q2d, w_q.T.astype(compute_dtype), compute_dtype)
    q_proj = q_proj[:B * Qp].reshape(B, Qp, H)               # (B, Qp, H)

    # ---- Phase 1b: key projection, emitted pre-transposed (B, H, Kp) ----
    kz = jnp.pad(keys, ((0, 0), (0, Kp - K), (0, 0))).astype(compute_dtype)
    kT_proj = _project_keys_transposed(kz, w_k.astype(compute_dtype), Kt,
                                       compute_dtype)        # (B, H, Kp)

    # Values as MXU inputs (bf16 halves their DMA; accumulation stays f32).
    vz = jnp.pad(values, ((0, 0), (0, Kp - K), (0, 0))).astype(compute_dtype)

    # Raw int8 mask stream (1 B/elem); padded keys/queries are marked masked.
    mz = jnp.pad(mask.astype(jnp.int8), ((0, 0), (0, Qp - Q), (0, Kp - K)),
                 constant_values=1)

    wv_flat = w_v.reshape(-1).astype(jnp.float32)            # (H,) -> SMEM

    grid = (B, Qp // Qt, Kp // Kt)
    kernel = functools.partial(_attn_kernel, num_hiddens=H,
                               compute_dtype=compute_dtype)

    out_p = pl.pallas_call(
        kernel,
        out_shape=jax.ShapeDtypeStruct((B, Qp, Dv), jnp.float32),
        grid_spec=pltpu.PrefetchScalarGridSpec(
            num_scalar_prefetch=0,
            grid=grid,
            in_specs=[
                # w_v: whole (H,) vector in SMEM; one f32 scalar read per h.
                pl.BlockSpec(memory_space=pltpu.MemorySpace.SMEM),
                pl.BlockSpec((None, Qt, H), lambda b, qi, ki: (b, qi, 0)),
                pl.BlockSpec((None, H, Kt), lambda b, qi, ki: (b, 0, ki)),
                pl.BlockSpec((None, Kt, Dv), lambda b, qi, ki: (b, ki, 0)),
                pl.BlockSpec((None, Qt, Kt), lambda b, qi, ki: (b, qi, ki)),
            ],
            out_specs=pl.BlockSpec((None, Qt, Dv), lambda b, qi, ki: (b, qi, 0)),
            scratch_shapes=[
                pltpu.VMEM((Qt, 1), jnp.float32),    # running max
                pltpu.VMEM((Qt, 1), jnp.float32),    # running sum
            ],
        ),
        compiler_params=pltpu.CompilerParams(
            dimension_semantics=("parallel", "parallel", "arbitrary")),
    )(wv_flat, q_proj, kT_proj, vz, mz)

    return out_p[:, :Q, :]


def _reference(queries, keys, values, mask, w_q, w_k, w_v):
    q_proj = jnp.einsum('bqd,hd->bqh', queries, w_q)
    k_proj = jnp.einsum('bkd,hd->bkh', keys, w_k)
    feats = jnp.tanh(q_proj[:, :, None, :] + k_proj[:, None, :, :])
    scores = jnp.einsum('bqkh,h->bqk', feats, w_v[0])
    scores = jnp.where(mask, -jnp.inf, scores)
    attn = jax.nn.softmax(scores, axis=-1)
    return jnp.einsum('bqk,bkv->bqv', attn, values)


if __name__ == "__main__":
    # Small shapes consistent with the module's forward.
    B, Q, K = 2, 8, 8
    query_size, key_size, num_hiddens, value_dim = 32, 32, 32, 32

    key = jax.random.PRNGKey(0)
    kq, kk, kv, kwq, kwk, kwv, km = jax.random.split(key, 7)

    queries = jax.random.normal(kq, (B, Q, query_size), dtype=jnp.float32)
    keys = jax.random.normal(kk, (B, K, key_size), dtype=jnp.float32)
    values = jax.random.normal(kv, (B, K, value_dim), dtype=jnp.float32)

    # Deterministic parameter init (nn.Linear-like uniform, bias=False).
    def _lin_init(rng, out_f, in_f):
        bound = 1.0 / jnp.sqrt(jnp.float32(in_f))
        return jax.random.uniform(rng, (out_f, in_f), jnp.float32,
                                  minval=-bound, maxval=bound)

    w_q = _lin_init(kwq, num_hiddens, query_size)   # W_q.weight (H, Dq)
    w_k = _lin_init(kwk, num_hiddens, key_size)     # W_k.weight (H, Dk)
    w_v = _lin_init(kwv, 1, num_hiddens)            # W_v.weight (1, H)

    # Boolean mask (True == masked); keep column 0 visible so the reference
    # softmax stays finite (the kernel itself is NaN-free either way).
    mask = jax.random.bernoulli(km, p=0.3, shape=(B, Q, K))
    mask = mask.at[:, :, 0].set(False)

    ref = _reference(queries, keys, values, mask, w_q, w_k, w_v)

    # Strict-accuracy path (f32 features) must match the f32 reference tightly.
    out_f32 = additive_attention(queries, keys, values, mask, w_q, w_k, w_v,
                                 compute_dtype=jnp.float32)
    out_f32 = jax.block_until_ready(out_f32)
    assert out_f32.shape == (B, Q, value_dim)
    assert jnp.allclose(out_f32, ref, atol=1e-5, rtol=1e-5)

    # Default fast path (bf16 features / MXU inputs, f32 accumulation):
    # compare against the f32 reference with bf16-appropriate tolerances.
    out_bf16 = additive_attention(queries, keys, values, mask, w_q, w_k, w_v)
    out_bf16 = jax.block_until_ready(out_bf16)
    assert out_bf16.shape == (B, Q, value_dim)
    assert jnp.allclose(out_bf16, ref, atol=1e-1, rtol=1e-1)

    print("KERNEL_OK")
</pallas_src>

<mosaic_0001>
module attributes {stable_mosaic.version = 11 : i64} {
  func.func @_row_proj_kernel(%arg0: i32, %arg1: memref<256x32xf32, #tpu.memory_space<vmem>>, %arg2: memref<32x32xf32, #tpu.memory_space<vmem>>, %arg3: memref<256x32xf32, #tpu.memory_space<vmem>>) attributes {dimension_semantics = [#tpu.dimension_semantics<parallel>], iteration_bounds = array<i64: 1>, scalar_prefetch = 0 : i64, scratch_operands = 0 : i64, tpu.core_type = #tpu.core_type<tc>, window_params = [{transform_indices = @transform_0, window_bounds = array<i64: 256, 32>}, {pipeline_mode = #tpu.pipeline_mode<synchronous>, transform_indices = @transform_1, window_bounds = array<i64: 32, 32>}, {transform_indices = @transform_2, window_bounds = array<i64: 256, 32>}]} {
    %c0 = arith.constant 0 : index
    %c0_0 = arith.constant 0 : index
    %0 = vector.load %arg1[%c0, %c0_0] : memref<256x32xf32, #tpu.memory_space<vmem>>, vector<256x32xf32>
    %c0_1 = arith.constant 0 : index
    %c0_2 = arith.constant 0 : index
    %1 = vector.load %arg2[%c0_1, %c0_2] : memref<32x32xf32, #tpu.memory_space<vmem>>, vector<32x32xf32>
    %cst = arith.constant dense<0.000000e+00> : vector<256x32xf32>
    %2 = tpu.matmul %0, %1, %cst {dimension_numbers = #tpu.dot_dimension_numbers<[1], [0], [0], [1], [0, 0, 1, 1], [], []>} : vector<256x32xf32>, vector<32x32xf32>, vector<256x32xf32> -> vector<256x32xf32>
    %c0_3 = arith.constant 0 : index
    %c0_4 = arith.constant 0 : index
    %3 = vector.load %arg3[%c0_3, %c0_4] : memref<256x32xf32, #tpu.memory_space<vmem>>, vector<256x32xf32>
    tpu.vector_store %arg3[%c0_3, %c0_4], %2 {strides = array<i32>} : memref<256x32xf32, #tpu.memory_space<vmem>>, vector<256x32xf32>,
    return
  }
  func.func @transform_0(%arg0: i32) -> (i32, i32) {
    %c0_i32 = arith.constant 0 : i32
    %c0_i32_0 = arith.constant 0 : i32
    return %arg0, %c0_i32 : i32, i32
  }
  func.func @transform_1(%arg0: i32) -> (i32, i32) {
    %c0_i32 = arith.constant 0 : i32
    %c0_i32_0 = arith.constant 0 : i32
    %c0_i32_1 = arith.constant 0 : i32
    return %c0_i32, %c0_i32_0 : i32, i32
  }
  func.func @transform_2(%arg0: i32) -> (i32, i32) {
    %c0_i32 = arith.constant 0 : i32
    %c0_i32_0 = arith.constant 0 : i32
    return %arg0, %c0_i32 : i32, i32
  }
}

</mosaic_0001>

<llo_original>
// kernel: tpu_custom_call.1
$region0: #{tpu_custom_call.1}
  #allocation0 [shape = 'u32[]', space=smem, size = 0x4, offset = 0x4, fixed_abs, tag = 'smem constant byte address 0x4 - core index']
  #allocation1 [shape = 'u32[72,128]{1,0:T(1,128)}', space=vmem, size = 0x9000, scoped, tag = 'internal scratch']
  %s0 = inlined_call_operand.vmem [shape: f32[256,32], index: 0, kind: input, shape index: {}]
  %s1 = inlined_call_operand.vmem [shape: f32[32,32], index: 1, kind: input, shape index: {}]
  %s2 = inlined_call_operand.vmem [shape: f32[256,32], index: 2, kind: output, shape index: {}]
  %s3 = sld [smem:[#allocation0]]
  $region18: #{tpu_custom_call.1} parent=0
    _
  %s5 = ssub.s32 1, %s3
  %s6 = scalar_select 0, %s5, %s3
  // Predicated region
  $region2: #{tpu_custom_call.1} parent=0 // pred_check
    _
  $region3: #{tpu_custom_call.1} parent=0 // pred_check_branch
    %8 = sbr.rel (0) target = $region5
  $region4: #{tpu_custom_call.1} parent=0 // pred_region
    _
  $region5: #{tpu_custom_call.1} parent=0 // pred_fallthru
    _
  // Predicated region
  $region6: #{tpu_custom_call.1} parent=0 // pred_check
    _
  $region7: #{tpu_custom_call.1} parent=0 // pred_check_branch
    %10 = sbr.rel (0) target = $region9
  $region8: #{tpu_custom_call.1} parent=0 // pred_region
    _
  $region9: #{tpu_custom_call.1} parent=0 // pred_fallthru
    _
  %v11 = vld [vmem:[%s0] sm:$0xff]
  %v12 = vld [vmem:[%s0 + $0x8] sm:$0xff]
  %v13 = vld [vmem:[%s0 + $0x10] sm:$0xff]
  %v14 = vld [vmem:[%s0 + $0x18] sm:$0xff]
  %v15 = vld [vmem:[%s0 + $0x20] sm:$0xff]
  %v16 = vld [vmem:[%s0 + $0x28] sm:$0xff]
  %v17 = vld [vmem:[%s0 + $0x30] sm:$0xff]
  %v18 = vld [vmem:[%s0 + $0x38] sm:$0xff]
  %v19 = vld [vmem:[%s0 + $0x40] sm:$0xff]
  %v20 = vld [vmem:[%s0 + $0x48] sm:$0xff]
  %v21 = vld [vmem:[%s0 + $0x50] sm:$0xff]
  %v22 = vld [vmem:[%s0 + $0x58] sm:$0xff]
  %v23 = vld [vmem:[%s0 + $0x60] sm:$0xff]
  %v24 = vld [vmem:[%s0 + $0x68] sm:$0xff]
  %v25 = vld [vmem:[%s0 + $0x70] sm:$0xff]
  %v26 = vld [vmem:[%s0 + $0x78] sm:$0xff]
  %v27 = vld [vmem:[%s0 + $0x80] sm:$0xff]
  %v28 = vld [vmem:[%s0 + $0x88] sm:$0xff]
  %v29 = vld [vmem:[%s0 + $0x90] sm:$0xff]
  %v30 = vld [vmem:[%s0 + $0x98] sm:$0xff]
  %v31 = vld [vmem:[%s0 + $0xa0] sm:$0xff]
  %v32 = vld [vmem:[%s0 + $0xa8] sm:$0xff]
  %v33 = vld [vmem:[%s0 + $0xb0] sm:$0xff]
  %v34 = vld [vmem:[%s0 + $0xb8] sm:$0xff]
  %v35 = vld [vmem:[%s0 + $0xc0] sm:$0xff]
  %v36 = vld [vmem:[%s0 + $0xc8] sm:$0xff]
  %v37 = vld [vmem:[%s0 + $0xd0] sm:$0xff]
  %v38 = vld [vmem:[%s0 + $0xd8] sm:$0xff]
  %v39 = vld [vmem:[%s0 + $0xe0] sm:$0xff]
  %v40 = vld [vmem:[%s0 + $0xe8] sm:$0xff]
  %v41 = vld [vmem:[%s0 + $0xf0] sm:$0xff]
  %v42 = vld [vmem:[%s0 + $0xf8] sm:$0xff]
  %v43 = vld [vmem:[%s1] sm:$0xff]
  %v44 = vld [vmem:[%s1 + $0x8] sm:$0xff]
  %v45 = vld [vmem:[%s1 + $0x10] sm:$0xff]
  %v46 = vld [vmem:[%s1 + $0x18] sm:$0xff]
  %vm47 = vcmask 261120
  %v49 = vsel %vm47, %v11, 0
  %v52 = vsel %vm47, %v12, 0
  %v55 = vsel %vm47, %v13, 0
  %v58 = vsel %vm47, %v14, 0
  %v61 = vsel %vm47, %v15, 0
  %v64 = vsel %vm47, %v16, 0
  %v67 = vsel %vm47, %v17, 0
  %v70 = vsel %vm47, %v18, 0
  %v73 = vsel %vm47, %v19, 0
  %v76 = vsel %vm47, %v20, 0
  %v79 = vsel %vm47, %v21, 0
  %v82 = vsel %vm47, %v22, 0
  %v85 = vsel %vm47, %v23, 0
  %v88 = vsel %vm47, %v24, 0
  %v91 = vsel %vm47, %v25, 0
  %v94 = vsel %vm47, %v26, 0
  %v97 = vsel %vm47, %v27, 0
  %v100 = vsel %vm47, %v28, 0
  %v103 = vsel %vm47, %v29, 0
  %v106 = vsel %vm47, %v30, 0
  %v109 = vsel %vm47, %v31, 0
  %v112 = vsel %vm47, %v32, 0
  %v115 = vsel %vm47, %v33, 0
  %v118 = vsel %vm47, %v34, 0
  %v121 = vsel %vm47, %v35, 0
  %v124 = vsel %vm47, %v36, 0
  %v127 = vsel %vm47, %v37, 0
  %v130 = vsel %vm47, %v38, 0
  %v133 = vsel %vm47, %v39, 0
  %v136 = vsel %vm47, %v40, 0
  %v139 = vsel %vm47, %v41, 0
  %v142 = vsel %vm47, %v42, 0
  %144 = vmatpush.msra.mxu0 0.0
  %145 = vmatpush.msra.mxu0 0.0
  %146 = vmatpush.msra.mxu0 0.0
  %147 = vmatpush.msra.mxu0 0.0
  %148 = vmatpush.msra.mxu0 0.0
  %149 = vmatpush.msra.mxu0 0.0
  %150 = vmatpush.msra.mxu0 0.0
  %151 = vmatpush.msra.mxu0 0.0
  %152 = vmatpush.msra.mxu0 0.0
  %153 = vmatpush.msra.mxu0 0.0
  %154 = vmatpush.msra.mxu0 0.0
  %155 = vmatpush.msra.mxu0 0.0
  %156 = vmatpush.msra.mxu0 %v46
  %157 = vmatpush.msra.mxu0 %v45
  %158 = vmatpush.msra.mxu0 %v44
  %159 = vmatpush.msra.mxu0 %v43
  %160 = vmatmul.f32.gmra.mxu0 %v49
  %v161 = vpop.f32.mrf.mxu0
  %v162 = vadd.f32 0.0, %v161
  %163 = vmatmul.f32.gmra.mxu0 %v52
  %v164 = vpop.f32.mrf.mxu0
  %v165 = vadd.f32 0.0, %v164
  %166 = vmatmul.f32.gmra.mxu0 %v55
  %v167 = vpop.f32.mrf.mxu0
  %v168 = vadd.f32 0.0, %v167
  %169 = vmatmul.f32.gmra.mxu0 %v58
  %v170 = vpop.f32.mrf.mxu0
  %v171 = vadd.f32 0.0, %v170
  %172 = vmatmul.f32.gmra.mxu0 %v61
  %v173 = vpop.f32.mrf.mxu0
  %v174 = vadd.f32 0.0, %v173
  %175 = vmatmul.f32.gmra.mxu0 %v64
  %v176 = vpop.f32.mrf.mxu0
  %v177 = vadd.f32 0.0, %v176
  %178 = vmatmul.f32.gmra.mxu0 %v67
  %v179 = vpop.f32.mrf.mxu0
  %v180 = vadd.f32 0.0, %v179
  %181 = vmatmul.f32.gmra.mxu0 %v70
  %v182 = vpop.f32.mrf.mxu0
  %v183 = vadd.f32 0.0, %v182
  %184 = vmatmul.f32.gmra.mxu0 %v73
  %v185 = vpop.f32.mrf.mxu0
  %v186 = vadd.f32 0.0, %v185
  %187 = vmatmul.f32.gmra.mxu0 %v76
  %v188 = vpop.f32.mrf.mxu0
  %v189 = vadd.f32 0.0, %v188
  %190 = vmatmul.f32.gmra.mxu0 %v79
  %v191 = vpop.f32.mrf.mxu0
  %v192 = vadd.f32 0.0, %v191
  %193 = vmatmul.f32.gmra.mxu0 %v82
  %v194 = vpop.f32.mrf.mxu0
  %v195 = vadd.f32 0.0, %v194
  %196 = vmatmul.f32.gmra.mxu0 %v85
  %v197 = vpop.f32.mrf.mxu0
  %v198 = vadd.f32 0.0, %v197
  %199 = vmatmul.f32.gmra.mxu0 %v88
  %v200 = vpop.f32.mrf.mxu0
  %v201 = vadd.f32 0.0, %v200
  %202 = vmatmul.f32.gmra.mxu0 %v91
  %v203 = vpop.f32.mrf.mxu0
  %v204 = vadd.f32 0.0, %v203
  %205 = vmatmul.f32.gmra.mxu0 %v94
  %v206 = vpop.f32.mrf.mxu0
  %v207 = vadd.f32 0.0, %v206
  %208 = vmatmul.f32.gmra.mxu0 %v97
  %v209 = vpop.f32.mrf.mxu0
  %v210 = vadd.f32 0.0, %v209
  %211 = vmatmul.f32.gmra.mxu0 %v100
  %v212 = vpop.f32.mrf.mxu0
  %v213 = vadd.f32 0.0, %v212
  %214 = vmatmul.f32.gmra.mxu0 %v103
  %v215 = vpop.f32.mrf.mxu0
  %v216 = vadd.f32 0.0, %v215
  %217 = vmatmul.f32.gmra.mxu0 %v106
  %v218 = vpop.f32.mrf.mxu0
  %v219 = vadd.f32 0.0, %v218
  %220 = vmatmul.f32.gmra.mxu0 %v109
  %v221 = vpop.f32.mrf.mxu0
  %v222 = vadd.f32 0.0, %v221
  %223 = vmatmul.f32.gmra.mxu0 %v112
  %v224 = vpop.f32.mrf.mxu0
  %v225 = vadd.f32 0.0, %v224
  %226 = vmatmul.f32.gmra.mxu0 %v115
  %v227 = vpop.f32.mrf.mxu0
  %v228 = vadd.f32 0.0, %v227
  %229 = vmatmul.f32.gmra.mxu0 %v118
  %v230 = vpop.f32.mrf.mxu0
  %v231 = vadd.f32 0.0, %v230
  %232 = vmatmul.f32.gmra.mxu0 %v121
  %v233 = vpop.f32.mrf.mxu0
  %v234 = vadd.f32 0.0, %v233
  %235 = vmatmul.f32.gmra.mxu0 %v124
  %v236 = vpop.f32.mrf.mxu0
  %v237 = vadd.f32 0.0, %v236
  %238 = vmatmul.f32.gmra.mxu0 %v127
  %v239 = vpop.f32.mrf.mxu0
  %v240 = vadd.f32 0.0, %v239
  %241 = vmatmul.f32.gmra.mxu0 %v130
  %v242 = vpop.f32.mrf.mxu0
  %v243 = vadd.f32 0.0, %v242
  %244 = vmatmul.f32.gmra.mxu0 %v133
  %v245 = vpop.f32.mrf.mxu0
  %v246 = vadd.f32 0.0, %v245
  %247 = vmatmul.f32.gmra.mxu0 %v136
  %v248 = vpop.f32.mrf.mxu0
  %v249 = vadd.f32 0.0, %v248
  %250 = vmatmul.f32.gmra.mxu0 %v139
  %v251 = vpop.f32.mrf.mxu0
  %v252 = vadd.f32 0.0, %v251
  %253 = vmatmul.f32.gmra.mxu0 %v142
  %v254 = vpop.f32.mrf.mxu0
  %v255 = vadd.f32 0.0, %v254
  %256 = vdwg.mxu0
  %257 = vst.msk [vmem:[%s2] sm:$0xff] %vm47, %v162
  %258 = vst.msk [vmem:[%s2 + $0x8] sm:$0xff] %vm47, %v165
  %259 = vst.msk [vmem:[%s2 + $0x10] sm:$0xff] %vm47, %v168
  %260 = vst.msk [vmem:[%s2 + $0x18] sm:$0xff] %vm47, %v171
  %261 = vst.msk [vmem:[%s2 + $0x20] sm:$0xff] %vm47, %v174
  %262 = vst.msk [vmem:[%s2 + $0x28] sm:$0xff] %vm47, %v177
  %263 = vst.msk [vmem:[%s2 + $0x30] sm:$0xff] %vm47, %v180
  %264 = vst.msk [vmem:[%s2 + $0x38] sm:$0xff] %vm47, %v183
  %265 = vst.msk [vmem:[%s2 + $0x40] sm:$0xff] %vm47, %v186
  %266 = vst.msk [vmem:[%s2 + $0x48] sm:$0xff] %vm47, %v189
  %267 = vst.msk [vmem:[%s2 + $0x50] sm:$0xff] %vm47, %v192
  %268 = vst.msk [vmem:[%s2 + $0x58] sm:$0xff] %vm47, %v195
  %269 = vst.msk [vmem:[%s2 + $0x60] sm:$0xff] %vm47, %v198
  %270 = vst.msk [vmem:[%s2 + $0x68] sm:$0xff] %vm47, %v201
  %271 = vst.msk [vmem:[%s2 + $0x70] sm:$0xff] %vm47, %v204
  %272 = vst.msk [vmem:[%s2 + $0x78] sm:$0xff] %vm47, %v207
  %273 = vst.msk [vmem:[%s2 + $0x80] sm:$0xff] %vm47, %v210
  %274 = vst.msk [vmem:[%s2 + $0x88] sm:$0xff] %vm47, %v213
  %275 = vst.msk [vmem:[%s2 + $0x90] sm:$0xff] %vm47, %v216
  %276 = vst.msk [vmem:[%s2 + $0x98] sm:$0xff] %vm47, %v219
  %277 = vst.msk [vmem:[%s2 + $0xa0] sm:$0xff] %vm47, %v222
  %278 = vst.msk [vmem:[%s2 + $0xa8] sm:$0xff] %vm47, %v225
  %279 = vst.msk [vmem:[%s2 + $0xb0] sm:$0xff] %vm47, %v228
  %280 = vst.msk [vmem:[%s2 + $0xb8] sm:$0xff] %vm47, %v231
  %281 = vst.msk [vmem:[%s2 + $0xc0] sm:$0xff] %vm47, %v234
  %282 = vst.msk [vmem:[%s2 + $0xc8] sm:$0xff] %vm47, %v237
  %283 = vst.msk [vmem:[%s2 + $0xd0] sm:$0xff] %vm47, %v240
  %284 = vst.msk [vmem:[%s2 + $0xd8] sm:$0xff] %vm47, %v243
  %285 = vst.msk [vmem:[%s2 + $0xe0] sm:$0xff] %vm47, %v246
  %286 = vst.msk [vmem:[%s2 + $0xe8] sm:$0xff] %vm47, %v249
  %287 = vst.msk [vmem:[%s2 + $0xf0] sm:$0xff] %vm47, %v252
  %288 = vst.msk [vmem:[%s2 + $0xf8] sm:$0xff] %vm47, %v255
  // Predicated region
  $region10: #{tpu_custom_call.1} parent=0 // pred_check
    _
  $region11: #{tpu_custom_call.1} parent=0 // pred_check_branch
    %290 = sbr.rel (0) target = $region13
  $region12: #{tpu_custom_call.1} parent=0 // pred_region
    _
  $region13: #{tpu_custom_call.1} parent=0 // pred_fallthru
    _
  // Predicated region
  $region14: #{tpu_custom_call.1} parent=0 // pred_check
    _
  $region15: #{tpu_custom_call.1} parent=0 // pred_check_branch
    %292 = sbr.rel (0) target = $region17
  $region16: #{tpu_custom_call.1} parent=0 // pred_region
    _
  $region17: #{tpu_custom_call.1} parent=0 // pred_fallthru
    _

</llo_original>
